<compile_context>
chip_gen: v5e
topology: v5e:2x2
jax: 0.10.0
libtpu: 0.0.40
codegen_flags: <defaults>
</compile_context>

<pallas_src>
import functools

import jax
import jax.numpy as jnp
from jax import lax
from jax.experimental import pallas as pl
from jax.experimental.pallas import tpu as pltpu


# ----------------------------------------------------------------------------
# one-time parameter prep (hoisted out of every per-step path)
# ----------------------------------------------------------------------------
def prepare_params(wh, bh, wo, bo, mxu_dtype=jnp.bfloat16):
    """Fuse i2h/i2o and split the fused weight by input vs hidden rows.

    wh: [H, I+H], bh: [H], wo: [O, I+H], bo: [O]   (PyTorch nn.Linear layout)
    Returns:
      w_x [I, H+O] (mxu_dtype), w_h [H, H+O] (mxu_dtype), b [1, H+O] (f32)
    so that  cat(x, h) @ W_fused + b == x @ w_x + h @ w_h + b
    (torch.cat is never materialized).
    """
    hidden_size = wh.shape[0]
    input_size = wh.shape[1] - hidden_size
    w_fused = jnp.concatenate([wh.T, wo.T], axis=1)            # [I+H, H+O]
    b_fused = jnp.concatenate([bh, bo]).reshape(1, -1).astype(jnp.float32)
    w_x = w_fused[:input_size].astype(mxu_dtype)
    w_h = w_fused[input_size:].astype(mxu_dtype)
    return w_x, w_h, b_fused


def _log_softmax(logits):
    """Numerically-stable log_softmax along the last (lane) axis, in f32."""
    m = jnp.max(logits, axis=-1, keepdims=True)
    shifted = logits - m
    lse = jnp.log(jnp.sum(jnp.exp(shifted), axis=-1, keepdims=True))
    return shifted - lse


# ----------------------------------------------------------------------------
# single-step kernel (matches RNN.forward exactly)
# ----------------------------------------------------------------------------
def rnn_step_kernel(x_ref, h_ref, wx_ref, wh_ref, b_ref, out_ref, hid_ref, *,
                    hidden_size):
    dt = wx_ref.dtype  # MXU input dtype (bf16 or f32); accumulation is f32
    y = (jnp.dot(x_ref[...].astype(dt), wx_ref[...],
                 preferred_element_type=jnp.float32)
         + jnp.dot(h_ref[...].astype(dt), wh_ref[...],
                   preferred_element_type=jnp.float32)
         + b_ref[...])
    hid_ref[...] = y[:, :hidden_size].astype(hid_ref.dtype)
    out_ref[...] = _log_softmax(y[:, hidden_size:]).astype(out_ref.dtype)


def rnn_forward(input_, hidden, w_x, w_h, b, *, output_size):
    """Pallas equivalent of RNN.forward(input_, hidden) -> (log_softmax, hidden)."""
    B, input_size = input_.shape
    hidden_size = hidden.shape[1]
    N = hidden_size + output_size
    K = input_size + hidden_size

    vmem = pl.BlockSpec(memory_space=pltpu.MemorySpace.VMEM)
    cost = pl.CostEstimate(
        flops=2 * B * K * N,
        transcendentals=B * (output_size + 1),
        bytes_accessed=int(4 * (B * K + B * N) + w_x.dtype.itemsize * K * N + 4 * N),
    )
    out, hid = pl.pallas_call(
        functools.partial(rnn_step_kernel, hidden_size=hidden_size),
        out_shape=(
            jax.ShapeDtypeStruct((B, output_size), jnp.float32),
            jax.ShapeDtypeStruct((B, hidden_size), jnp.float32),
        ),
        in_specs=[vmem] * 5,
        out_specs=(vmem, vmem),
        compiler_params=pltpu.CompilerParams(vmem_limit_bytes=32 * 1024 * 1024),
        cost_estimate=cost,
    )(input_, hidden, w_x, w_h, b)
    return out, hid


# ----------------------------------------------------------------------------
# parallel input-projection kernel:  xproj = xs @ W_x + b   (all timesteps)
# Runs as a row-blocked 2-D GEMM over the flattened (T*B, I) input.
# ----------------------------------------------------------------------------
def xproj_kernel(x_ref, wx_ref, b_ref, out_ref):
    y = jnp.dot(x_ref[...].astype(wx_ref.dtype), wx_ref[...],
                preferred_element_type=jnp.float32) + b_ref[...]
    out_ref[...] = y.astype(out_ref.dtype)


# ----------------------------------------------------------------------------
# serial recurrence kernel: TB timesteps per grid step, hidden + W_h resident.
# ----------------------------------------------------------------------------
def rnn_seq_kernel(xp_ref, h0_ref, wh_ref, out_ref, hfinal_ref, h_scr, *,
                   hidden_size, time_block, seq_len, padded):
    blk = pl.program_id(0)

    @pl.when(blk == 0)
    def _():
        h_scr[...] = h0_ref[...].astype(jnp.float32)

    dt = wh_ref.dtype

    def step(i, h):
        # Serial critical path: ONE small GEMM (h @ W_h).  Input projection and
        # bias were precomputed by the parallel xproj kernel.
        y = jnp.dot(h.astype(dt), wh_ref[...],
                    preferred_element_type=jnp.float32) + xp_ref[i]
        new_h = y[:, :hidden_size]
        # Per-step store goes to the pipelined VMEM output block; the HBM
        # writeback is ONE DMA per TB steps (blocked out_spec).
        out_ref[i] = _log_softmax(y[:, hidden_size:]).astype(out_ref.dtype)
        if padded:  # static: only emitted when T % TB != 0
            new_h = jnp.where(blk * time_block + i < seq_len, new_h, h)
        return new_h

    h_final = lax.fori_loop(0, time_block, step, h_scr[...], unroll=True)
    h_scr[...] = h_final

    @pl.when(blk == pl.num_programs(0) - 1)
    def _():
        hfinal_ref[...] = h_final.astype(hfinal_ref.dtype)


def rnn_sequence(xs, h0, w_x, w_h, b, *, output_size, time_block=8):
    """Runs the RNN cell over a whole sequence.

    xs: [T, B, I], h0: [B, H].
    Returns (log_softmax outputs [T, B, O], final hidden [B, H]).
    Each step is semantically identical to RNN.forward.
    """
    T, B, input_size = xs.shape
    hidden_size = h0.shape[1]
    N = hidden_size + output_size

    tb = min(time_block, T)
    num_blocks = pl.cdiv(T, tb)
    T_pad = num_blocks * tb
    padded = T_pad != T
    if padded:
        xs = jnp.pad(xs, ((0, T_pad - T), (0, 0), (0, 0)))

    # ---------------- parallel hoisted input projection --------------------
    xs_flat = xs.reshape(T_pad * B, input_size)
    xproj_flat = pl.pallas_call(
        xproj_kernel,
        out_shape=jax.ShapeDtypeStruct((T_pad * B, N), jnp.float32),
        grid_spec=pltpu.PrefetchScalarGridSpec(
            num_scalar_prefetch=0,
            grid=(num_blocks,),
            in_specs=[
                pl.BlockSpec((tb * B, input_size), lambda t: (t, 0)),  # xs rows
                pl.BlockSpec((input_size, N), lambda t: (0, 0)),       # W_x (resident)
                pl.BlockSpec((1, N), lambda t: (0, 0)),                # bias (resident)
            ],
            out_specs=pl.BlockSpec((tb * B, N), lambda t: (t, 0)),
        ),
        compiler_params=pltpu.CompilerParams(
            dimension_semantics=("parallel",),
            vmem_limit_bytes=32 * 1024 * 1024),
        cost_estimate=pl.CostEstimate(
            flops=2 * T_pad * B * input_size * N,
            transcendentals=0,
            bytes_accessed=int(4 * T_pad * B * input_size + 4 * T_pad * B * N
                               + w_x.dtype.itemsize * input_size * N + 4 * N)),
    )(xs_flat, w_x, b)
    xproj = xproj_flat.reshape(T_pad, B, N)

    # ---------------- serial recurrence, TB steps per grid iteration -------
    # TODO(synk): batch-parallel ("parallel","arbitrary") megacore split for
    # v7x needs B>=16 per core and H+O padded to a multiple of 128 lanes.
    out, h_final = pl.pallas_call(
        functools.partial(rnn_seq_kernel, hidden_size=hidden_size,
                          time_block=tb, seq_len=T, padded=padded),
        out_shape=(
            jax.ShapeDtypeStruct((T_pad, B, output_size), jnp.float32),
            jax.ShapeDtypeStruct((B, hidden_size), jnp.float32),
        ),
        grid_spec=pltpu.PrefetchScalarGridSpec(
            num_scalar_prefetch=0,
            grid=(num_blocks,),
            in_specs=[
                pl.BlockSpec((tb, B, N), lambda t: (t, 0, 0)),         # xproj block
                pl.BlockSpec((B, hidden_size), lambda t: (0, 0)),      # h0 (resident)
                pl.BlockSpec((hidden_size, N), lambda t: (0, 0)),      # W_h (resident)
            ],
            out_specs=(
                pl.BlockSpec((tb, B, output_size), lambda t: (t, 0, 0)),  # blocked out
                pl.BlockSpec((B, hidden_size), lambda t: (0, 0)),         # final hidden
            ),
            scratch_shapes=[pltpu.VMEM((B, hidden_size), jnp.float32)],   # resident h
        ),
        compiler_params=pltpu.CompilerParams(
            dimension_semantics=("arbitrary",),   # time carries the recurrence
            vmem_limit_bytes=32 * 1024 * 1024),
        cost_estimate=pl.CostEstimate(
            flops=2 * T_pad * B * hidden_size * N,
            transcendentals=T_pad * B * (output_size + 1),
            bytes_accessed=int(4 * (T_pad * B * N + T_pad * B * output_size
                                    + 2 * B * hidden_size)
                               + w_h.dtype.itemsize * hidden_size * N)),
    )(xproj, h0, w_h)

    if padded:
        out = out[:T]
    return out, h_final


# ----------------------------------------------------------------------------
# parameter init mimicking nn.Linear defaults (U(-1/sqrt(fan_in), +))
# ----------------------------------------------------------------------------
def init_params(key, input_size, hidden_size, output_size):
    k1, k2, k3, k4 = jax.random.split(key, 4)
    fan_in = input_size + hidden_size
    bound = 1.0 / jnp.sqrt(float(fan_in))
    wh = jax.random.uniform(k1, (hidden_size, fan_in), jnp.float32, -bound, bound)
    bh = jax.random.uniform(k2, (hidden_size,), jnp.float32, -bound, bound)
    wo = jax.random.uniform(k3, (output_size, fan_in), jnp.float32, -bound, bound)
    bo = jax.random.uniform(k4, (output_size,), jnp.float32, -bound, bound)
    return wh, bh, wo, bo


if __name__ == "__main__":
    input_size, hidden_size, output_size = 16, 32, 8
    batch, seq_len, time_block = 8, 10, 4   # T % TB != 0 -> exercises tail masking

    key = jax.random.PRNGKey(0)
    kx, ks, kp = jax.random.split(key, 3)
    x = jax.random.normal(kx, (batch, input_size), jnp.float32)
    xs = jax.random.normal(ks, (seq_len, batch, input_size), jnp.float32)
    h0 = jnp.zeros((batch, hidden_size), jnp.float32)   # init_hidden, batch-broadcast

    wh, bh, wo, bo = init_params(kp, input_size, hidden_size, output_size)

    # pure-JAX reference (exactly the PyTorch forward)
    def ref_step(x_, h_):
        combined = jnp.concatenate([x_, h_], axis=1)
        rh = combined @ wh.T + bh
        ro = jax.nn.log_softmax(combined @ wo.T + bo, axis=1)
        return ro, rh

    h = h0
    ref_outs = []
    for t in range(seq_len):
        o, h = ref_step(xs[t], h)
        ref_outs.append(o)
    ref_outs = jnp.stack(ref_outs)
    ref_hfinal = h

    # --- f32 path: exact check against the reference ---
    w_x32, w_h32, b32 = prepare_params(wh, bh, wo, bo, mxu_dtype=jnp.float32)

    out1, h1 = rnn_forward(x, h0, w_x32, w_h32, b32, output_size=output_size)
    jax.block_until_ready((out1, h1))
    r_out1, r_h1 = ref_step(x, h0)
    assert jnp.allclose(out1, r_out1, atol=1e-5), "step output mismatch"
    assert jnp.allclose(h1, r_h1, atol=1e-5), "step hidden mismatch"

    outs32, hf32 = rnn_sequence(xs, h0, w_x32, w_h32, b32,
                                output_size=output_size, time_block=time_block)
    jax.block_until_ready((outs32, hf32))
    assert jnp.allclose(outs32, ref_outs, atol=1e-4), "sequence outputs mismatch"
    assert jnp.allclose(hf32, ref_hfinal, atol=1e-4), "sequence final hidden mismatch"

    # --- bf16 MXU path (v6e/v7x fast path; f32 accumulation + f32 softmax) ---
    w_xbf, w_hbf, bbf = prepare_params(wh, bh, wo, bo, mxu_dtype=jnp.bfloat16)
    outsbf, hfbf = rnn_sequence(xs, h0, w_xbf, w_hbf, bbf,
                                output_size=output_size, time_block=time_block)
    jax.block_until_ready((outsbf, hfbf))
    assert jnp.allclose(outsbf, ref_outs, atol=5e-2), "bf16 sequence outputs diverged"
    assert jnp.allclose(hfbf, ref_hfinal, atol=5e-2), "bf16 final hidden diverged"

    print("KERNEL_OK")
</pallas_src>

<mosaic_0001>
module attributes {stable_mosaic.version = 11 : i64} {
  func.func @rnn_step_kernel(%arg0: memref<8x16xf32, #tpu.memory_space<vmem>>, %arg1: memref<8x32xf32, #tpu.memory_space<vmem>>, %arg2: memref<16x40xf32, #tpu.memory_space<vmem>>, %arg3: memref<32x40xf32, #tpu.memory_space<vmem>>, %arg4: memref<1x40xf32, #tpu.memory_space<vmem>>, %arg5: memref<8x8xf32, #tpu.memory_space<vmem>>, %arg6: memref<8x32xf32, #tpu.memory_space<vmem>>) attributes {dimension_semantics = [], scalar_prefetch = 0 : i64, scratch_operands = 0 : i64, tpu.core_type = #tpu.core_type<tc>} {
    %c0 = arith.constant 0 : index
    %c0_0 = arith.constant 0 : index
    %0 = vector.load %arg0[%c0, %c0_0] : memref<8x16xf32, #tpu.memory_space<vmem>>, vector<8x16xf32>
    %c0_1 = arith.constant 0 : index
    %c0_2 = arith.constant 0 : index
    %1 = vector.load %arg2[%c0_1, %c0_2] : memref<16x40xf32, #tpu.memory_space<vmem>>, vector<16x40xf32>
    %cst = arith.constant dense<0.000000e+00> : vector<8x40xf32>
    %2 = tpu.matmul %0, %1, %cst {dimension_numbers = #tpu.dot_dimension_numbers<[1], [0], [0], [1], [0, 0, 1, 1], [], []>} : vector<8x16xf32>, vector<16x40xf32>, vector<8x40xf32> -> vector<8x40xf32>
    %c0_3 = arith.constant 0 : index
    %c0_4 = arith.constant 0 : index
    %3 = vector.load %arg1[%c0_3, %c0_4] : memref<8x32xf32, #tpu.memory_space<vmem>>, vector<8x32xf32>
    %c0_5 = arith.constant 0 : index
    %c0_6 = arith.constant 0 : index
    %4 = vector.load %arg3[%c0_5, %c0_6] : memref<32x40xf32, #tpu.memory_space<vmem>>, vector<32x40xf32>
    %cst_7 = arith.constant dense<0.000000e+00> : vector<8x40xf32>
    %5 = tpu.matmul %3, %4, %cst_7 {dimension_numbers = #tpu.dot_dimension_numbers<[1], [0], [0], [1], [0, 0, 1, 1], [], []>} : vector<8x32xf32>, vector<32x40xf32>, vector<8x40xf32> -> vector<8x40xf32>
    %6 = arith.addf %2, %5 : vector<8x40xf32>
    %c0_8 = arith.constant 0 : index
    %c0_9 = arith.constant 0 : index
    %7 = vector.load %arg4[%c0_8, %c0_9] : memref<1x40xf32, #tpu.memory_space<vmem>>, vector<1x40xf32>
    %8 = vector.broadcast %7 : vector<1x40xf32> to vector<8x40xf32>
    %9 = arith.addf %6, %8 : vector<8x40xf32>
    %10 = vector.extract_strided_slice %9 {offsets = [0, 0], sizes = [8, 32], strides = [1, 1]} : vector<8x40xf32> to vector<8x32xf32>
    %c0_10 = arith.constant 0 : index
    %c0_11 = arith.constant 0 : index
    %11 = vector.load %arg6[%c0_10, %c0_11] : memref<8x32xf32, #tpu.memory_space<vmem>>, vector<8x32xf32>
    tpu.vector_store %arg6[%c0_10, %c0_11], %10 {strides = array<i32>} : memref<8x32xf32, #tpu.memory_space<vmem>>, vector<8x32xf32>,
    %12 = vector.extract_strided_slice %9 {offsets = [0, 32], sizes = [8, 8], strides = [1, 1]} : vector<8x40xf32> to vector<8x8xf32>
    %cst_12 = arith.constant dense<0xFF800000> : vector<8xf32>
    %13 = vector.multi_reduction <maximumf>, %12, %cst_12 [1] : vector<8x8xf32> to vector<8xf32>
    %14 = vector.shape_cast %13 : vector<8xf32> to vector<8x1xf32>
    %15 = vector.broadcast %14 : vector<8x1xf32> to vector<8x8xf32>
    %16 = arith.subf %12, %15 : vector<8x8xf32>
    %17 = math.exp %16 : vector<8x8xf32>
    %cst_13 = arith.constant dense<0.000000e+00> : vector<8xf32>
    %18 = vector.multi_reduction <add>, %17, %cst_13 [1] : vector<8x8xf32> to vector<8xf32>
    %19 = vector.shape_cast %18 : vector<8xf32> to vector<8x1xf32>
    %20 = math.log %19 : vector<8x1xf32>
    %21 = vector.broadcast %20 : vector<8x1xf32> to vector<8x8xf32>
    %22 = arith.subf %16, %21 : vector<8x8xf32>
    %c0_14 = arith.constant 0 : index
    %c0_15 = arith.constant 0 : index
    %23 = vector.load %arg5[%c0_14, %c0_15] : memref<8x8xf32, #tpu.memory_space<vmem>>, vector<8x8xf32>
    tpu.vector_store %arg5[%c0_14, %c0_15], %22 {strides = array<i32>} : memref<8x8xf32, #tpu.memory_space<vmem>>, vector<8x8xf32>,
    return
  }
}

</mosaic_0001>

<llo_original>
// kernel: tpu_custom_call.1
$region0: #{tpu_custom_call.1}
  #allocation0 [shape = 'u32[]', space=smem, size = 0x4, offset = 0x4, fixed_abs, tag = 'smem constant byte address 0x4 - core index']
  #allocation1 [shape = 'u32[72,128]{1,0:T(1,128)}', space=vmem, size = 0x9000, scoped, tag = 'internal scratch']
  %s0 = inlined_call_operand.hbm [shape: f32[8,16], index: 0, kind: input, shape index: {}]
  %s1 = inlined_call_operand.hbm [shape: f32[8,32], index: 1, kind: input, shape index: {}]
  %s2 = inlined_call_operand.hbm [shape: f32[16,40], index: 2, kind: input, shape index: {}]
  %s3 = inlined_call_operand.hbm [shape: f32[32,40], index: 3, kind: input, shape index: {}]
  %s4 = inlined_call_operand.vmem [shape: f32[1,40], index: 4, kind: input, shape index: {}]
  %s5 = inlined_call_operand.hbm [shape: f32[8,8], index: 5, kind: output, shape index: {0}]
  %s6 = inlined_call_operand.hbm [shape: f32[8,32], index: 6, kind: output, shape index: {1}]
  %7 = xla_tuple %s5, %s6
  %s8 = sld [smem:[#allocation0]]
  $region54: #{tpu_custom_call.1} parent=0
    _
  %s10 = ssub.s32 1, %s8
  %s11 = scalar_select 0, %s10, %s8
  $region1: #{tpu_custom_call.1} parent=0
    #allocation2 [shape = 'u8[4096]{0}', space=vmem, size = 0x1000, scoped, tag = 'input window, operand 0, single buffered']
    #allocation3 [shape = 's32[1]{0}', space=sflag, size = 0x4, scoped, tag = 'scoped memory for tpu_custom_call.1']
    #allocation4 [shape = 's32[1]{0}', space=sflag, size = 0x4, scoped, tag = 'scoped memory for tpu_custom_call.1']
    #allocation5 [shape = 'u8[4096]{0}', space=vmem, size = 0x1000, scoped, tag = 'input window, operand 1, single buffered']
    #allocation6 [shape = 's32[1]{0}', space=sflag, size = 0x4, scoped, tag = 'scoped memory for tpu_custom_call.1']
    #allocation7 [shape = 'u8[8192]{0}', space=vmem, size = 0x2000, scoped, tag = 'input window, operand 2, single buffered']
    #allocation8 [shape = 'u8[16384]{0}', space=vmem, size = 0x4000, scoped, tag = 'input window, operand 3, single buffered']
    #allocation9 [shape = 's32[1]{0}', space=sflag, size = 0x4, scoped, tag = 'scoped memory for tpu_custom_call.1']
    #allocation10 [shape = 'u8[4096]{0}', space=vmem, size = 0x1000, scoped, tag = 'output window, operand 0, single buffered']
    #allocation11 [shape = 'u8[4096]{0}', space=vmem, size = 0x1000, scoped, tag = 'output window, operand 1, single buffered']
    #allocation12 [shape = 's32[1]{0}', space=sflag, size = 0x4, scoped, tag = 'scoped memory for tpu_custom_call.1']
    %12 = vsyncpa [#allocation3], 0
    %13 = vsyncpa [#allocation6], 0
    %14 = vsyncpa [#allocation9], 0
    %15 = vsyncpa [#allocation4], 0
    %16 = vsyncpa [#allocation12], 0
    // Predicated region
    $region2: #{tpu_custom_call.1} parent=1 // pred_check
      _
    $region3: #{tpu_custom_call.1} parent=1 // pred_check_branch
      %18 = sbr.rel (0) target = $region5
    $region4: #{tpu_custom_call.1} parent=1 // pred_region
      %20 = vsyncadd [#allocation3], 0
      %s22 = sshll.u32 %s0, 4
      %s23 = int_to_ptr.hbm [resolvable:$true] %s22
      %s24 = sshll.u32 [#allocation2], 4
      %s25 = int_to_ptr.vmem [resolvable:$true] %s24
      %27 = dma.hbm_to_vmem [thread:$0]  %s23, 128, %s25, [#allocation3]
    $region5: #{tpu_custom_call.1} parent=1 // pred_fallthru
      _
    // Predicated region
    $region6: #{tpu_custom_call.1} parent=1 // pred_check
      _
    $region7: #{tpu_custom_call.1} parent=1 // pred_check_branch
      %29 = sbr.rel (0) target = $region9
    $region8: #{tpu_custom_call.1} parent=1 // pred_region
      %31 = vsyncadd [#allocation6], 0
      %s33 = sshll.u32 %s1, 4
      %s34 = int_to_ptr.hbm [resolvable:$true] %s33
      %s35 = sshll.u32 [#allocation5], 4
      %s36 = int_to_ptr.vmem [resolvable:$true] %s35
      %38 = dma.hbm_to_vmem [thread:$0]  %s34, 128, %s36, [#allocation6]
    $region9: #{tpu_custom_call.1} parent=1 // pred_fallthru
      _
    // Predicated region
    $region10: #{tpu_custom_call.1} parent=1 // pred_check
      _
    $region11: #{tpu_custom_call.1} parent=1 // pred_check_branch
      %40 = sbr.rel (0) target = $region13
    $region12: #{tpu_custom_call.1} parent=1 // pred_region
      %42 = vsyncadd [#allocation6], 0
      %s43 = sshll.u32 %s2, 4
      %s44 = int_to_ptr.hbm [resolvable:$true] %s43
      %s45 = sshll.u32 [#allocation7], 4
      %s46 = int_to_ptr.vmem [resolvable:$true] %s45
      %51 = dma.hbm_to_vmem [thread:$0]  %s44, 256, %s46, [#allocation6], 128, 128, 8
    $region13: #{tpu_custom_call.1} parent=1 // pred_fallthru
      _
    // Predicated region
    $region14: #{tpu_custom_call.1} parent=1 // pred_check
      _
    $region15: #{tpu_custom_call.1} parent=1 // pred_check_branch
      %53 = sbr.rel (0) target = $region17
    $region16: #{tpu_custom_call.1} parent=1 // pred_region
      %55 = vsyncadd [#allocation9], 0
      %s56 = sshll.u32 %s3, 4
      %s57 = int_to_ptr.hbm [resolvable:$true] %s56
      %s58 = sshll.u32 [#allocation8], 4
      %s59 = int_to_ptr.vmem [resolvable:$true] %s58
      %64 = dma.hbm_to_vmem [thread:$0]  %s57, 512, %s59, [#allocation9], 128, 128, 8
    $region17: #{tpu_custom_call.1} parent=1 // pred_fallthru
      _
    // Predicated region
    $region18: #{tpu_custom_call.1} parent=1 // pred_check
      _
    $region19: #{tpu_custom_call.1} parent=1 // pred_check_branch
      %66 = sbr.rel (0) target = $region21
    $region20: #{tpu_custom_call.1} parent=1 // pred_region
      _
    $region21: #{tpu_custom_call.1} parent=1 // pred_fallthru
      _
    // Predicated region
    $region22: #{tpu_custom_call.1} parent=1 // pred_check
      _
    $region23: #{tpu_custom_call.1} parent=1 // pred_check_branch
      %68 = sbr.rel (0) target = $region25
    $region24: #{tpu_custom_call.1} parent=1 // pred_region
      %70 = dma.done [#allocation3], 128
    $region25: #{tpu_custom_call.1} parent=1 // pred_fallthru
      _
    // Predicated region
    $region26: #{tpu_custom_call.1} parent=1 // pred_check
      _
    $region27: #{tpu_custom_call.1} parent=1 // pred_check_branch
      %72 = sbr.rel (0) target = $region29
    $region28: #{tpu_custom_call.1} parent=1 // pred_region
      %74 = dma.done [#allocation6], 128
    $region29: #{tpu_custom_call.1} parent=1 // pred_fallthru
      _
    // Predicated region
    $region30: #{tpu_custom_call.1} parent=1 // pred_check
      _
    $region31: #{tpu_custom_call.1} parent=1 // pred_check_branch
      %76 = sbr.rel (0) target = $region33
    $region32: #{tpu_custom_call.1} parent=1 // pred_region
      %78 = dma.done [#allocation6], 256
    $region33: #{tpu_custom_call.1} parent=1 // pred_fallthru
      _
    // Predicated region
    $region34: #{tpu_custom_call.1} parent=1 // pred_check
      _
    $region35: #{tpu_custom_call.1} parent=1 // pred_check_branch
      %80 = sbr.rel (0) target = $region37
    $region36: #{tpu_custom_call.1} parent=1 // pred_region
      %82 = dma.done [#allocation9], 512
    $region37: #{tpu_custom_call.1} parent=1 // pred_fallthru
      _
    %v83 = vld [vmem:[#allocation2] sm:$0xff]
    %v84 = vld [vmem:[#allocation7] sm:$0xff]
    %v85 = vld [vmem:[#allocation7 + $0x8] sm:$0xff]
    %v86 = vld [vmem:[#allocation5] sm:$0xff]
    %v87 = vld [vmem:[#allocation8] sm:$0xff]
    %v88 = vld [vmem:[#allocation8 + $0x8] sm:$0xff]
    %v89 = vld [vmem:[#allocation8 + $0x10] sm:$0xff]
    %v90 = vld [vmem:[#allocation8 + $0x18] sm:$0xff]
    %vm91 = vcmask 261120
    %v93 = vsel %vm91, %v86, 0
    %95 = vmatpush.msra.mxu0 0.0
    %96 = vmatpush.msra.mxu0 0.0
    %97 = vmatpush.msra.mxu0 0.0
    %98 = vmatpush.msra.mxu0 0.0
    %99 = vmatpush.msra.mxu0 0.0
    %100 = vmatpush.msra.mxu0 0.0
    %101 = vmatpush.msra.mxu0 0.0
    %102 = vmatpush.msra.mxu0 0.0
    %103 = vmatpush.msra.mxu0 0.0
    %104 = vmatpush.msra.mxu0 0.0
    %105 = vmatpush.msra.mxu0 0.0
    %106 = vmatpush.msra.mxu0 0.0
    %107 = vmatpush.msra.mxu0 %v90
    %108 = vmatpush.msra.mxu0 %v89
    %109 = vmatpush.msra.mxu0 %v88
    %110 = vmatpush.msra.mxu0 %v87
    %111 = vmatmul.f32.gmra.mxu0 %v93
    %v112 = vpop.f32.mrf.mxu0
    %v113 = vadd.f32 0.0, %v112
    %114 = vdwg.mxu0
    %vm115 = vcmask 130048
    %v117 = vsel %vm115, %v83, 0
    %119 = vmatpush.msra.mxu0 0.0
    %120 = vmatpush.msra.mxu0 0.0
    %121 = vmatpush.msra.mxu0 0.0
    %122 = vmatpush.msra.mxu0 0.0
    %123 = vmatpush.msra.mxu0 0.0
    %124 = vmatpush.msra.mxu0 0.0
    %125 = vmatpush.msra.mxu0 0.0
    %126 = vmatpush.msra.mxu0 0.0
    %127 = vmatpush.msra.mxu0 0.0
    %128 = vmatpush.msra.mxu0 0.0
    %129 = vmatpush.msra.mxu0 0.0
    %130 = vmatpush.msra.mxu0 0.0
    %131 = vmatpush.msra.mxu0 0.0
    %132 = vmatpush.msra.mxu0 0.0
    %133 = vmatpush.msra.mxu0 %v85
    %134 = vmatpush.msra.mxu0 %v84
    %135 = vmatmul.f32.gmra.mxu0 %v117
    %v136 = vpop.f32.mrf.mxu0
    %v137 = vadd.f32 %v113, %v136
    %138 = vdwg.mxu0
    %v139 = vld [vmem:[%s4] sm:$0x1]
    %v141 = vperm.slane %v139, 0
    %v143 = vadd.f32 %v137, %v141
    %144 = vst.msk [vmem:[#allocation11] sm:$0xff] %vm91, %v143
    %vm145 = vcmask 326912
    %v146 = vsel %vm145, %v143, -inf
    %147 = vmax.xlane.f32.xlu0 %v146
    %v148 = vpop.xlane.xlu0 %147
    %v149 = vsub.f32 %v143, %v148
    %v150 = vmul.f32 %v149, 1.442695
    %v151 = vpow.pop %v150
    %153 = vrot.lane.b32.xlu0 %v151, 96
    %v154 = vpop.permute.xlu0 %153
    %vm156 = vcmask 64512
    %v157 = vsel %vm156, %v154, 0.0
    %158 = vadd.xlane.f32.xlu0 %v157
    %v159 = vpop.xlane.xlu0 %158
    %v160 = vlog2.pop %v159
    %v161 = vmul.f32 %v160, 0.6931472
    %v162 = vsub.f32 %v149, %v161
    %164 = vrot.lane.b32.xlu0 %v162, 96
    %v165 = vpop.permute.xlu0 %164
    %167 = vst.msk [vmem:[#allocation10] sm:$0xff] %vm156, %v165
    // Predicated region
    $region38: #{tpu_custom_call.1} parent=1 // pred_check
      _
    $region39: #{tpu_custom_call.1} parent=1 // pred_check_branch
      %169 = sbr.rel (0) target = $region41
    $region40: #{tpu_custom_call.1} parent=1 // pred_region
      %171 = vsyncadd [#allocation4], 0
      %s173 = sshll.u32 [#allocation10], 4
      %s174 = int_to_ptr.vmem [resolvable:$true] %s173
      %s175 = sshll.u32 %s5, 4
      %s176 = int_to_ptr.hbm [resolvable:$true] %s175
      %178 = dma.vmem_to_hbm [thread:$0]  %s174, 128, %s176, [#allocation4]
    $region41: #{tpu_custom_call.1} parent=1 // pred_fallthru
      _
    // Predicated region
    $region42: #{tpu_custom_call.1} parent=1 // pred_check
      _
    $region43: #{tpu_custom_call.1} parent=1 // pred_check_branch
      %180 = sbr.rel (0) target = $region45
    $region44: #{tpu_custom_call.1} parent=1 // pred_region
      %182 = vsyncadd [#allocation12], 0
      %s184 = sshll.u32 [#allocation11], 4
      %s185 = int_to_ptr.vmem [resolvable:$true] %s184
      %s186 = sshll.u32 %s6, 4
      %s187 = int_to_ptr.hbm [resolvable:$true] %s186
      %189 = dma.vmem_to_hbm [thread:$0]  %s185, 128, %s187, [#allocation12]
    $region45: #{tpu_custom_call.1} parent=1 // pred_fallthru
      _
    // Predicated region
    $region46: #{tpu_custom_call.1} parent=1 // pred_check
      _
    $region47: #{tpu_custom_call.1} parent=1 // pred_check_branch
      %191 = sbr.rel (0) target = $region49
    $region48: #{tpu_custom_call.1} parent=1 // pred_region
      %193 = dma.done [#allocation4], 128
    $region49: #{tpu_custom_call.1} parent=1 // pred_fallthru
      _
    // Predicated region
    $region50: #{tpu_custom_call.1} parent=1 // pred_check
      _
    $region51: #{tpu_custom_call.1} parent=1 // pred_check_branch
      %195 = sbr.rel (0) target = $region53
    $region52: #{tpu_custom_call.1} parent=1 // pred_region
      %197 = dma.done [#allocation12], 128
    $region53: #{tpu_custom_call.1} parent=1 // pred_fallthru
      _
    %198 = vsyncpa [#allocation3], 1
    %199 = vsyncpa [#allocation6], 1
    %200 = vsyncpa [#allocation9], 1
    %201 = vsyncpa [#allocation4], 1
    %202 = vsyncpa [#allocation12], 1

</llo_original>
